<compile_context>
chip_gen: v6e
topology: v6e:2x2x1
jax: 0.10.0
libtpu: 0.0.40
codegen_flags: <defaults>
</compile_context>

<pallas_src>
import functools

import jax
import jax.numpy as jnp
from jax.experimental import pallas as pl
from jax.experimental.pallas import tpu as pltpu

S_LEN = 8                      # input feature length (small synthetic choice)
H1, H2, OUT = 100, 50, 1       # logical (PyTorch) feature widths
H1P, H2P, OUTP = 128, 128, 128  # zero-padded, lane-dense widths for intermediates


def _mlp_kernel(x_ref, w1_ref, b1_ref, w2_ref, b2_ref, w3_ref, b3_ref, o_ref):
    # Fused 3-layer MLP on one batch tile.  x arrives as f32 straight from HBM;
    # cast to the compute dtype in-kernel (VPU slack) instead of a wrapper-side
    # pad/astype pass.  Matmuls accumulate in f32 on the MXU; bias adds / ReLUs
    # run in f32 on the VPU.
    x = x_ref[...].astype(w1_ref.dtype)

    h1 = jnp.dot(x, w1_ref[...], preferred_element_type=jnp.float32) + b1_ref[...]
    h1 = jnp.maximum(h1, 0.0)

    h2 = jnp.dot(h1.astype(w2_ref.dtype), w2_ref[...],
                 preferred_element_type=jnp.float32) + b2_ref[...]
    h2 = jnp.maximum(h2, 0.0)

    y = jnp.dot(h2.astype(w3_ref.dtype), w3_ref[...],
                preferred_element_type=jnp.float32) + b3_ref[...]

    # Only column 0 is the real prediction (zero padding elsewhere is exact);
    # store a compact (bt, 1) block -> 4 B/row of HBM writeback.
    o_ref[...] = y[:, :1].astype(o_ref.dtype)


def _round_up(n, m):
    return ((n + m - 1) // m) * m


def _pad2(a, shape):
    return jnp.pad(a, ((0, shape[0] - a.shape[0]), (0, shape[1] - a.shape[1])))


@functools.partial(jax.jit, static_argnames=("compute_dtype", "block_b"))
def net_forward(x, params, *, compute_dtype=jnp.bfloat16, block_b=4096):
    """x: [B, S_LEN] float32.  params: dict of unpadded w1,b1,w2,b2,w3,b3.

    Returns [B, 1] float32.
    """
    B = x.shape[0]

    # Batch tile: multiple of 8 (f32 sublanes), capped at block_b.  If the batch is
    # larger than one tile but would give <4 grid steps, split into ~4 tiles so both
    # v7x TensorCores get work and the input prefetch stays pipelined.
    bt = min(block_b, _round_up(B, 8))
    if bt < B <= 4 * bt:
        bt = _round_up(-(-B // 4), 8)
    bp = _round_up(B, bt)

    # Only pad the batch when strictly necessary (no wrapper-side cast of x).
    xp = x if bp == B else jnp.pad(x, ((0, bp - B), (0, 0)))

    # Weights are tiny and reused across the whole grid: cast once in the wrapper.
    w1 = _pad2(params["w1"], (S_LEN, H1P)).astype(compute_dtype)
    w2 = _pad2(params["w2"], (H1P, H2P)).astype(compute_dtype)
    w3 = _pad2(params["w3"], (H2P, OUTP)).astype(compute_dtype)
    b1 = _pad2(params["b1"], (1, H1P)).astype(jnp.float32)
    b2 = _pad2(params["b2"], (1, H2P)).astype(jnp.float32)
    b3 = _pad2(params["b3"], (1, OUTP)).astype(jnp.float32)

    grid = (bp // bt,)
    const = lambda shape: pl.BlockSpec(shape, lambda i: (0, 0))  # VMEM-resident operand

    flops = 2 * bp * (S_LEN * H1P + H1P * H2P + H2P * OUTP)
    bytes_accessed = (
        xp.size * xp.dtype.itemsize                      # streamed f32 input
        + bp * 1 * 4                                     # compact f32 output
        + sum(a.size * a.dtype.itemsize for a in (w1, w2, w3, b1, b2, b3))
    )

    yp = pl.pallas_call(
        _mlp_kernel,
        out_shape=jax.ShapeDtypeStruct((bp, 1), jnp.float32),
        grid=grid,
        in_specs=[
            pl.BlockSpec((bt, S_LEN), lambda i: (i, 0)),   # streamed, double-buffered
            const((S_LEN, H1P)), const((1, H1P)),
            const((H1P, H2P)), const((1, H2P)),
            const((H2P, OUTP)), const((1, OUTP)),
        ],
        out_specs=pl.BlockSpec((bt, 1), lambda i: (i, 0)),
        compiler_params=pltpu.CompilerParams(
            dimension_semantics=("parallel",),             # megacore on v7x
            vmem_limit_bytes=32 * 1024 * 1024,             # big tiles fit on v5e too
        ),
        cost_estimate=pl.CostEstimate(
            flops=flops, transcendentals=0, bytes_accessed=bytes_accessed),
    )(xp, w1, b1, w2, b2, w3, b3)

    # Strip batch padding only; output is already compact [*, 1].
    return yp[:B] if bp != B else yp


def init_params(key):
    """Deterministic init mimicking torch.nn.Linear default (U[-1/sqrt(fan_in), 1/sqrt(fan_in)])."""
    def linear(key, fan_in, fan_out):
        kw, kb = jax.random.split(key)
        bound = 1.0 / jnp.sqrt(fan_in)
        w = jax.random.uniform(kw, (fan_in, fan_out), jnp.float32, -bound, bound)
        b = jax.random.uniform(kb, (1, fan_out), jnp.float32, -bound, bound)
        return w, b

    k1, k2, k3 = jax.random.split(key, 3)
    w1, b1 = linear(k1, S_LEN, H1)
    w2, b2 = linear(k2, H1, H2)
    w3, b3 = linear(k3, H2, OUT)
    return dict(w1=w1, b1=b1, w2=w2, b2=b2, w3=w3, b3=b3)


def _reference(x, p):
    h1 = jnp.maximum(x @ p["w1"] + p["b1"], 0.0)
    h2 = jnp.maximum(h1 @ p["w2"] + p["b2"], 0.0)
    return h2 @ p["w3"] + p["b3"]


if __name__ == "__main__":
    key = jax.random.PRNGKey(0)
    kx, kp = jax.random.split(key)

    B = 16
    x = jax.random.normal(kx, (B, S_LEN), jnp.float32)
    params = init_params(kp)

    ref = _reference(x, params)

    # Exact f32 path vs reference.
    out_f32 = jax.block_until_ready(net_forward(x, params, compute_dtype=jnp.float32))
    assert out_f32.shape == (B, OUT)
    assert jnp.allclose(out_f32, ref, atol=1e-5, rtol=1e-5), "f32 kernel mismatch vs reference"

    # bf16-weights / f32-accumulate path (default, bandwidth-optimized): loose tolerance.
    out_bf16 = jax.block_until_ready(net_forward(x, params, compute_dtype=jnp.bfloat16))
    assert out_bf16.shape == (B, OUT)
    assert jnp.allclose(out_bf16, ref, atol=5e-2, rtol=5e-2), "bf16 kernel mismatch vs reference"

    print("KERNEL_OK")
</pallas_src>

<mosaic_0001>
module attributes {stable_mosaic.version = 11 : i64} {
  func.func @_mlp_kernel(%arg0: i32, %arg1: memref<16x8xf32, #tpu.memory_space<vmem>>, %arg2: memref<8x128xf32, #tpu.memory_space<vmem>>, %arg3: memref<1x128xf32, #tpu.memory_space<vmem>>, %arg4: memref<128x128xf32, #tpu.memory_space<vmem>>, %arg5: memref<1x128xf32, #tpu.memory_space<vmem>>, %arg6: memref<128x128xf32, #tpu.memory_space<vmem>>, %arg7: memref<1x128xf32, #tpu.memory_space<vmem>>, %arg8: memref<16x1xf32, #tpu.memory_space<vmem>>) attributes {dimension_semantics = [#tpu.dimension_semantics<parallel>], iteration_bounds = array<i64: 1>, scalar_prefetch = 0 : i64, scratch_operands = 0 : i64, tpu.core_type = #tpu.core_type<tc>, window_params = [{transform_indices = @transform_0, window_bounds = array<i64: 16, 8>}, {pipeline_mode = #tpu.pipeline_mode<synchronous>, transform_indices = @transform_1, window_bounds = array<i64: 8, 128>}, {pipeline_mode = #tpu.pipeline_mode<synchronous>, transform_indices = @transform_2, window_bounds = array<i64: 1, 128>}, {pipeline_mode = #tpu.pipeline_mode<synchronous>, transform_indices = @transform_3, window_bounds = array<i64: 128, 128>}, {pipeline_mode = #tpu.pipeline_mode<synchronous>, transform_indices = @transform_4, window_bounds = array<i64: 1, 128>}, {pipeline_mode = #tpu.pipeline_mode<synchronous>, transform_indices = @transform_5, window_bounds = array<i64: 128, 128>}, {pipeline_mode = #tpu.pipeline_mode<synchronous>, transform_indices = @transform_6, window_bounds = array<i64: 1, 128>}, {transform_indices = @transform_7, window_bounds = array<i64: 16, 1>}]} {
    %c0 = arith.constant 0 : index
    %c0_0 = arith.constant 0 : index
    %0 = vector.load %arg1[%c0, %c0_0] : memref<16x8xf32, #tpu.memory_space<vmem>>, vector<16x8xf32>
    %c0_1 = arith.constant 0 : index
    %c0_2 = arith.constant 0 : index
    %1 = vector.load %arg2[%c0_1, %c0_2] : memref<8x128xf32, #tpu.memory_space<vmem>>, vector<8x128xf32>
    %cst = arith.constant dense<0.000000e+00> : vector<16x128xf32>
    %2 = tpu.matmul %0, %1, %cst {dimension_numbers = #tpu.dot_dimension_numbers<[1], [0], [0], [1], [0, 0, 1, 1], [], []>} : vector<16x8xf32>, vector<8x128xf32>, vector<16x128xf32> -> vector<16x128xf32>
    %c0_3 = arith.constant 0 : index
    %c0_4 = arith.constant 0 : index
    %3 = vector.load %arg3[%c0_3, %c0_4] : memref<1x128xf32, #tpu.memory_space<vmem>>, vector<1x128xf32>
    %4 = vector.broadcast %3 : vector<1x128xf32> to vector<16x128xf32>
    %5 = arith.addf %2, %4 : vector<16x128xf32>
    %cst_5 = arith.constant 0.000000e+00 : f32
    %6 = vector.broadcast %cst_5 : f32 to vector<16x128xf32>
    %7 = arith.maximumf %5, %6 : vector<16x128xf32>
    %c0_6 = arith.constant 0 : index
    %c0_7 = arith.constant 0 : index
    %8 = vector.load %arg4[%c0_6, %c0_7] : memref<128x128xf32, #tpu.memory_space<vmem>>, vector<128x128xf32>
    %cst_8 = arith.constant dense<0.000000e+00> : vector<16x128xf32>
    %9 = tpu.matmul %7, %8, %cst_8 {dimension_numbers = #tpu.dot_dimension_numbers<[1], [0], [0], [1], [0, 0, 1, 1], [], []>} : vector<16x128xf32>, vector<128x128xf32>, vector<16x128xf32> -> vector<16x128xf32>
    %c0_9 = arith.constant 0 : index
    %c0_10 = arith.constant 0 : index
    %10 = vector.load %arg5[%c0_9, %c0_10] : memref<1x128xf32, #tpu.memory_space<vmem>>, vector<1x128xf32>
    %11 = vector.broadcast %10 : vector<1x128xf32> to vector<16x128xf32>
    %12 = arith.addf %9, %11 : vector<16x128xf32>
    %cst_11 = arith.constant 0.000000e+00 : f32
    %13 = vector.broadcast %cst_11 : f32 to vector<16x128xf32>
    %14 = arith.maximumf %12, %13 : vector<16x128xf32>
    %c0_12 = arith.constant 0 : index
    %c0_13 = arith.constant 0 : index
    %15 = vector.load %arg6[%c0_12, %c0_13] : memref<128x128xf32, #tpu.memory_space<vmem>>, vector<128x128xf32>
    %cst_14 = arith.constant dense<0.000000e+00> : vector<16x128xf32>
    %16 = tpu.matmul %14, %15, %cst_14 {dimension_numbers = #tpu.dot_dimension_numbers<[1], [0], [0], [1], [0, 0, 1, 1], [], []>} : vector<16x128xf32>, vector<128x128xf32>, vector<16x128xf32> -> vector<16x128xf32>
    %c0_15 = arith.constant 0 : index
    %c0_16 = arith.constant 0 : index
    %17 = vector.load %arg7[%c0_15, %c0_16] : memref<1x128xf32, #tpu.memory_space<vmem>>, vector<1x128xf32>
    %18 = vector.broadcast %17 : vector<1x128xf32> to vector<16x128xf32>
    %19 = arith.addf %16, %18 : vector<16x128xf32>
    %20 = vector.extract_strided_slice %19 {offsets = [0, 0], sizes = [16, 1], strides = [1, 1]} : vector<16x128xf32> to vector<16x1xf32>
    %c0_17 = arith.constant 0 : index
    %c0_18 = arith.constant 0 : index
    %21 = vector.load %arg8[%c0_17, %c0_18] : memref<16x1xf32, #tpu.memory_space<vmem>>, vector<16x1xf32>
    tpu.vector_store %arg8[%c0_17, %c0_18], %20 {strides = array<i32>} : memref<16x1xf32, #tpu.memory_space<vmem>>, vector<16x1xf32>,
    return
  }
  func.func @transform_0(%arg0: i32) -> (i32, i32) {
    %c0_i32 = arith.constant 0 : i32
    %c0_i32_0 = arith.constant 0 : i32
    return %arg0, %c0_i32 : i32, i32
  }
  func.func @transform_1(%arg0: i32) -> (i32, i32) {
    %c0_i32 = arith.constant 0 : i32
    %c0_i32_0 = arith.constant 0 : i32
    %c0_i32_1 = arith.constant 0 : i32
    return %c0_i32, %c0_i32_0 : i32, i32
  }
  func.func @transform_2(%arg0: i32) -> (i32, i32) {
    %c0_i32 = arith.constant 0 : i32
    %c0_i32_0 = arith.constant 0 : i32
    %c0_i32_1 = arith.constant 0 : i32
    return %c0_i32, %c0_i32_0 : i32, i32
  }
  func.func @transform_3(%arg0: i32) -> (i32, i32) {
    %c0_i32 = arith.constant 0 : i32
    %c0_i32_0 = arith.constant 0 : i32
    %c0_i32_1 = arith.constant 0 : i32
    return %c0_i32, %c0_i32_0 : i32, i32
  }
  func.func @transform_4(%arg0: i32) -> (i32, i32) {
    %c0_i32 = arith.constant 0 : i32
    %c0_i32_0 = arith.constant 0 : i32
    %c0_i32_1 = arith.constant 0 : i32
    return %c0_i32, %c0_i32_0 : i32, i32
  }
  func.func @transform_5(%arg0: i32) -> (i32, i32) {
    %c0_i32 = arith.constant 0 : i32
    %c0_i32_0 = arith.constant 0 : i32
    %c0_i32_1 = arith.constant 0 : i32
    return %c0_i32, %c0_i32_0 : i32, i32
  }
  func.func @transform_6(%arg0: i32) -> (i32, i32) {
    %c0_i32 = arith.constant 0 : i32
    %c0_i32_0 = arith.constant 0 : i32
    %c0_i32_1 = arith.constant 0 : i32
    return %c0_i32, %c0_i32_0 : i32, i32
  }
  func.func @transform_7(%arg0: i32) -> (i32, i32) {
    %c0_i32 = arith.constant 0 : i32
    %c0_i32_0 = arith.constant 0 : i32
    return %arg0, %c0_i32 : i32, i32
  }
}

</mosaic_0001>

<llo_original>
// kernel: net_forward.1
$region0: #{net_forward.1}
  #allocation0 [shape = 'u32[]', space=smem, size = 0x4, offset = 0x4, fixed_abs, tag = 'smem constant byte address 0x4 - core index']
  #allocation1 [shape = 'u32[144,128]{1,0:T(1,128)}', space=vmem, size = 0x12000, scoped, tag = 'internal scratch']
  %s0 = inlined_call_operand.vmem [shape: f32[16,8], index: 0, kind: input, shape index: {}]
  %s1 = inlined_call_operand.vmem [shape: f32[8,128], index: 1, kind: input, shape index: {}]
  %s2 = inlined_call_operand.vmem [shape: f32[1,128], index: 2, kind: input, shape index: {}]
  %s3 = inlined_call_operand.vmem [shape: f32[128,128], index: 3, kind: input, shape index: {}]
  %s4 = inlined_call_operand.vmem [shape: f32[1,128], index: 4, kind: input, shape index: {}]
  %s5 = inlined_call_operand.vmem [shape: f32[128,128], index: 5, kind: input, shape index: {}]
  %s6 = inlined_call_operand.vmem [shape: f32[1,128], index: 6, kind: input, shape index: {}]
  %s7 = inlined_call_operand.vmem [shape: f32[16,1], index: 7, kind: output, shape index: {}]
  %s8 = sld [smem:[#allocation0]]
  $region38: #{net_forward.1} parent=0
    _
  %s10 = ssub.s32 1, %s8
  %s11 = scalar_select 0, %s10, %s8
  // Predicated region
  $region2: #{net_forward.1} parent=0 // pred_check
    _
  $region3: #{net_forward.1} parent=0 // pred_check_branch
    %13 = sbr.rel (0) target = $region5
  $region4: #{net_forward.1} parent=0 // pred_region
    _
  $region5: #{net_forward.1} parent=0 // pred_fallthru
    _
  // Predicated region
  $region6: #{net_forward.1} parent=0 // pred_check
    _
  $region7: #{net_forward.1} parent=0 // pred_check_branch
    %15 = sbr.rel (0) target = $region9
  $region8: #{net_forward.1} parent=0 // pred_region
    _
  $region9: #{net_forward.1} parent=0 // pred_fallthru
    _
  // Predicated region
  $region10: #{net_forward.1} parent=0 // pred_check
    _
  $region11: #{net_forward.1} parent=0 // pred_check_branch
    %17 = sbr.rel (0) target = $region13
  $region12: #{net_forward.1} parent=0 // pred_region
    _
  $region13: #{net_forward.1} parent=0 // pred_fallthru
    _
  // Predicated region
  $region14: #{net_forward.1} parent=0 // pred_check
    _
  $region15: #{net_forward.1} parent=0 // pred_check_branch
    %19 = sbr.rel (0) target = $region17
  $region16: #{net_forward.1} parent=0 // pred_region
    _
  $region17: #{net_forward.1} parent=0 // pred_fallthru
    _
  // Predicated region
  $region18: #{net_forward.1} parent=0 // pred_check
    _
  $region19: #{net_forward.1} parent=0 // pred_check_branch
    %21 = sbr.rel (0) target = $region21
  $region20: #{net_forward.1} parent=0 // pred_region
    _
  $region21: #{net_forward.1} parent=0 // pred_fallthru
    _
  // Predicated region
  $region22: #{net_forward.1} parent=0 // pred_check
    _
  $region23: #{net_forward.1} parent=0 // pred_check_branch
    %23 = sbr.rel (0) target = $region25
  $region24: #{net_forward.1} parent=0 // pred_region
    _
  $region25: #{net_forward.1} parent=0 // pred_fallthru
    _
  // Predicated region
  $region26: #{net_forward.1} parent=0 // pred_check
    _
  $region27: #{net_forward.1} parent=0 // pred_check_branch
    %25 = sbr.rel (0) target = $region29
  $region28: #{net_forward.1} parent=0 // pred_region
    _
  $region29: #{net_forward.1} parent=0 // pred_fallthru
    _
  %v26 = vld [vmem:[%s0] sm:$0xff]
  %v27 = vld [vmem:[%s0 + $0x8] sm:$0xff]
  %v28 = vld [vmem:[%s1] sm:$0xff]
  %v29 = vld [vmem:[%s2] sm:$0x1]
  %v31 = vlaneseq
  %v32 = vshrl.u32 %v31, 7
  %v33 = vsub.s32 0, %v32
  %v34 = vrot.slane %v29, %v33
  %vm36 = vcmask 64512
  %v38 = vsel %vm36, %v26, 0
  %v41 = vsel %vm36, %v27, 0
  %43 = vmatprep.subr.mxu0 0.0
  %44 = vmatpush1.msra.mxu0 0.0
  %45 = vmatprep.subr.mxu0 0.0
  %46 = vmatpush1.msra.mxu0 0.0
  %47 = vmatprep.subr.mxu0 0.0
  %48 = vmatpush1.msra.mxu0 0.0
  %49 = vmatprep.subr.mxu0 0.0
  %50 = vmatpush1.msra.mxu0 0.0
  %51 = vmatprep.subr.mxu0 0.0
  %52 = vmatpush1.msra.mxu0 0.0
  %53 = vmatprep.subr.mxu0 0.0
  %54 = vmatpush1.msra.mxu0 0.0
  %55 = vmatprep.subr.mxu0 0.0
  %56 = vmatpush1.msra.mxu0 0.0
  %57 = vmatprep.subr.mxu0 0.0
  %58 = vmatpush1.msra.mxu0 0.0
  %59 = vmatprep.subr.mxu0 0.0
  %60 = vmatpush1.msra.mxu0 0.0
  %61 = vmatprep.subr.mxu0 0.0
  %62 = vmatpush1.msra.mxu0 0.0
  %63 = vmatprep.subr.mxu0 0.0
  %64 = vmatpush1.msra.mxu0 0.0
  %65 = vmatprep.subr.mxu0 0.0
  %66 = vmatpush1.msra.mxu0 0.0
  %67 = vmatprep.subr.mxu0 0.0
  %68 = vmatpush1.msra.mxu0 0.0
  %69 = vmatprep.subr.mxu0 0.0
  %70 = vmatpush1.msra.mxu0 0.0
  %71 = vmatprep.subr.mxu0 0.0
  %72 = vmatpush1.msra.mxu0 0.0
  %73 = vmatprep.subr.mxu0 0.0
  %74 = vmatpush1.msra.mxu0 %v28
  %75 = vmatprep.subr.mxu0 0.0
  %76 = vmatpush2.msra.mxu0 0.0
  %77 = vmatprep.subr.mxu0 0.0
  %78 = vmatpush2.msra.mxu0 0.0
  %79 = vmatprep.subr.mxu0 0.0
  %80 = vmatpush2.msra.mxu0 0.0
  %81 = vmatprep.subr.mxu0 0.0
  %82 = vmatpush2.msra.mxu0 0.0
  %83 = vmatprep.subr.mxu0 0.0
  %84 = vmatpush2.msra.mxu0 0.0
  %85 = vmatprep.subr.mxu0 0.0
  %86 = vmatpush2.msra.mxu0 0.0
  %87 = vmatprep.subr.mxu0 0.0
  %88 = vmatpush2.msra.mxu0 0.0
  %89 = vmatprep.subr.mxu0 0.0
  %90 = vmatpush2.msra.mxu0 0.0
  %91 = vmatprep.subr.mxu0 0.0
  %92 = vmatpush2.msra.mxu0 0.0
  %93 = vmatprep.subr.mxu0 0.0
  %94 = vmatpush2.msra.mxu0 0.0
  %95 = vmatprep.subr.mxu0 0.0
  %96 = vmatpush2.msra.mxu0 0.0
  %97 = vmatprep.subr.mxu0 0.0
  %98 = vmatpush2.msra.mxu0 0.0
  %99 = vmatprep.subr.mxu0 0.0
  %100 = vmatpush2.msra.mxu0 0.0
  %101 = vmatprep.subr.mxu0 0.0
  %102 = vmatpush2.msra.mxu0 0.0
  %103 = vmatprep.subr.mxu0 0.0
  %104 = vmatpush2.msra.mxu0 0.0
  %105 = vmatprep.subr.mxu0 0.0
  %106 = vmatpush2.msra.mxu0 0.0
  %107 = vmatprep.mubr.f32.mxu0 0.0
  %108 = vmatmul.mubr.f32.gmra.mxu0 %v38
  %v109 = vpop.f32.mrf.mxu0
  %v110 = vadd.f32 %v34, %v109
  %v111 = vpop.f32.mrf.mxu0
  %112 = vmatprep.mubr.f32.mxu0 0.0
  %113 = vmatmul.mubr.f32.gmra.mxu0 %v41
  %v114 = vpop.f32.mrf.mxu0
  %v115 = vadd.f32 %v34, %v114
  %v116 = vpop.f32.mrf.mxu0
  %117 = vdwg.mxu0
  %v118 = vmax.f32 %v110, 0.0
  %v119 = vmax.f32 %v115, 0.0
  %v120 = vld [vmem:[%s3] sm:$0xff]
  %v121 = vld [vmem:[%s3 + $0x8] sm:$0xff]
  %v122 = vld [vmem:[%s3 + $0x10] sm:$0xff]
  %v123 = vld [vmem:[%s3 + $0x18] sm:$0xff]
  %v124 = vld [vmem:[%s3 + $0x20] sm:$0xff]
  %v125 = vld [vmem:[%s3 + $0x28] sm:$0xff]
  %v126 = vld [vmem:[%s3 + $0x30] sm:$0xff]
  %v127 = vld [vmem:[%s3 + $0x38] sm:$0xff]
  %v128 = vld [vmem:[%s3 + $0x40] sm:$0xff]
  %v129 = vld [vmem:[%s3 + $0x48] sm:$0xff]
  %v130 = vld [vmem:[%s3 + $0x50] sm:$0xff]
  %v131 = vld [vmem:[%s3 + $0x58] sm:$0xff]
  %v132 = vld [vmem:[%s3 + $0x60] sm:$0xff]
  %v133 = vld [vmem:[%s3 + $0x68] sm:$0xff]
  %v134 = vld [vmem:[%s3 + $0x70] sm:$0xff]
  %v135 = vld [vmem:[%s3 + $0x78] sm:$0xff]
  %v136 = vld [vmem:[%s4] sm:$0x1]
  %v138 = vlaneseq
  %v139 = vshrl.u32 %v138, 7
  %v140 = vsub.s32 0, %v139
  %v141 = vrot.slane %v136, %v140
  %143 = vmatprep.subr.mxu0 0.0
  %144 = vmatpush1.msra.mxu0 %v135
  %145 = vmatprep.subr.mxu0 0.0
  %146 = vmatpush1.msra.mxu0 %v134
  %147 = vmatprep.subr.mxu0 0.0
  %148 = vmatpush1.msra.mxu0 %v133
  %149 = vmatprep.subr.mxu0 0.0
  %150 = vmatpush1.msra.mxu0 %v132
  %151 = vmatprep.subr.mxu0 0.0
  %152 = vmatpush1.msra.mxu0 %v131
  %153 = vmatprep.subr.mxu0 0.0
  %154 = vmatpush1.msra.mxu0 %v130
  %155 = vmatprep.subr.mxu0 0.0
  %156 = vmatpush1.msra.mxu0 %v129
  %157 = vmatprep.subr.mxu0 0.0
  %158 = vmatpush1.msra.mxu0 %v128
  %159 = vmatprep.subr.mxu0 0.0
  %160 = vmatpush1.msra.mxu0 %v127
  %161 = vmatprep.subr.mxu0 0.0
  %162 = vmatpush1.msra.mxu0 %v126
  %163 = vmatprep.subr.mxu0 0.0
  %164 = vmatpush1.msra.mxu0 %v125
  %165 = vmatprep.subr.mxu0 0.0
  %166 = vmatpush1.msra.mxu0 %v124
  %167 = vmatprep.subr.mxu0 0.0
  %168 = vmatpush1.msra.mxu0 %v123
  %169 = vmatprep.subr.mxu0 0.0
  %170 = vmatpush1.msra.mxu0 %v122
  %171 = vmatprep.subr.mxu0 0.0
  %172 = vmatpush1.msra.mxu0 %v121
  %173 = vmatprep.subr.mxu0 0.0
  %174 = vmatpush1.msra.mxu0 %v120
  %175 = vmatprep.subr.mxu0 0.0
  %176 = vmatpush2.msra.mxu0 0.0
  %177 = vmatprep.subr.mxu0 0.0
  %178 = vmatpush2.msra.mxu0 0.0
  %179 = vmatprep.subr.mxu0 0.0
  %180 = vmatpush2.msra.mxu0 0.0
  %181 = vmatprep.subr.mxu0 0.0
  %182 = vmatpush2.msra.mxu0 0.0
  %183 = vmatprep.subr.mxu0 0.0
  %184 = vmatpush2.msra.mxu0 0.0
  %185 = vmatprep.subr.mxu0 0.0
  %186 = vmatpush2.msra.mxu0 0.0
  %187 = vmatprep.subr.mxu0 0.0
  %188 = vmatpush2.msra.mxu0 0.0
  %189 = vmatprep.subr.mxu0 0.0
  %190 = vmatpush2.msra.mxu0 0.0
  %191 = vmatprep.subr.mxu0 0.0
  %192 = vmatpush2.msra.mxu0 0.0
  %193 = vmatprep.subr.mxu0 0.0
  %194 = vmatpush2.msra.mxu0 0.0
  %195 = vmatprep.subr.mxu0 0.0
  %196 = vmatpush2.msra.mxu0 0.0
  %197 = vmatprep.subr.mxu0 0.0
  %198 = vmatpush2.msra.mxu0 0.0
  %199 = vmatprep.subr.mxu0 0.0
  %200 = vmatpush2.msra.mxu0 0.0
  %201 = vmatprep.subr.mxu0 0.0
  %202 = vmatpush2.msra.mxu0 0.0
  %203 = vmatprep.subr.mxu0 0.0
  %204 = vmatpush2.msra.mxu0 0.0
  %205 = vmatprep.subr.mxu0 0.0
  %206 = vmatpush2.msra.mxu0 0.0
  %207 = vmatprep.mubr.f32.mxu0 0.0
  %208 = vmatmul.mubr.f32.gmra.mxu0 %v118
  %v209 = vpop.f32.mrf.mxu0
  %v210 = vadd.f32 %v141, %v209
  %v211 = vpop.f32.mrf.mxu0
  %212 = vmatprep.mubr.f32.mxu0 0.0
  %213 = vmatmul.mubr.f32.gmra.mxu0 %v119
  %v214 = vpop.f32.mrf.mxu0
  %v215 = vadd.f32 %v141, %v214
  %v216 = vpop.f32.mrf.mxu0
  %217 = vdwg.mxu0
  %v218 = vmax.f32 %v210, 0.0
  %v219 = vmax.f32 %v215, 0.0
  %v220 = vld [vmem:[%s5] sm:$0xff]
  %v221 = vld [vmem:[%s5 + $0x8] sm:$0xff]
  %v222 = vld [vmem:[%s5 + $0x10] sm:$0xff]
  %v223 = vld [vmem:[%s5 + $0x18] sm:$0xff]
  %v224 = vld [vmem:[%s5 + $0x20] sm:$0xff]
  %v225 = vld [vmem:[%s5 + $0x28] sm:$0xff]
  %v226 = vld [vmem:[%s5 + $0x30] sm:$0xff]
  %v227 = vld [vmem:[%s5 + $0x38] sm:$0xff]
  %v228 = vld [vmem:[%s5 + $0x40] sm:$0xff]
  %v229 = vld [vmem:[%s5 + $0x48] sm:$0xff]
  %v230 = vld [vmem:[%s5 + $0x50] sm:$0xff]
  %v231 = vld [vmem:[%s5 + $0x58] sm:$0xff]
  %v232 = vld [vmem:[%s5 + $0x60] sm:$0xff]
  %v233 = vld [vmem:[%s5 + $0x68] sm:$0xff]
  %v234 = vld [vmem:[%s5 + $0x70] sm:$0xff]
  %v235 = vld [vmem:[%s5 + $0x78] sm:$0xff]
  %v236 = vld [vmem:[%s6] sm:$0x1]
  %v238 = vlaneseq
  %v239 = vshrl.u32 %v238, 7
  %v240 = vsub.s32 0, %v239
  %v241 = vrot.slane %v236, %v240
  %243 = vmatprep.subr.mxu0 0.0
  %244 = vmatpush1.msra.mxu0 %v235
  %245 = vmatprep.subr.mxu0 0.0
  %246 = vmatpush1.msra.mxu0 %v234
  %247 = vmatprep.subr.mxu0 0.0
  %248 = vmatpush1.msra.mxu0 %v233
  %249 = vmatprep.subr.mxu0 0.0
  %250 = vmatpush1.msra.mxu0 %v232
  %251 = vmatprep.subr.mxu0 0.0
  %252 = vmatpush1.msra.mxu0 %v231
  %253 = vmatprep.subr.mxu0 0.0
  %254 = vmatpush1.msra.mxu0 %v230
  %255 = vmatprep.subr.mxu0 0.0
  %256 = vmatpush1.msra.mxu0 %v229
  %257 = vmatprep.subr.mxu0 0.0
  %258 = vmatpush1.msra.mxu0 %v228
  %259 = vmatprep.subr.mxu0 0.0
  %260 = vmatpush1.msra.mxu0 %v227
  %261 = vmatprep.subr.mxu0 0.0
  %262 = vmatpush1.msra.mxu0 %v226
  %263 = vmatprep.subr.mxu0 0.0
  %264 = vmatpush1.msra.mxu0 %v225
  %265 = vmatprep.subr.mxu0 0.0
  %266 = vmatpush1.msra.mxu0 %v224
  %267 = vmatprep.subr.mxu0 0.0
  %268 = vmatpush1.msra.mxu0 %v223
  %269 = vmatprep.subr.mxu0 0.0
  %270 = vmatpush1.msra.mxu0 %v222
  %271 = vmatprep.subr.mxu0 0.0
  %272 = vmatpush1.msra.mxu0 %v221
  %273 = vmatprep.subr.mxu0 0.0
  %274 = vmatpush1.msra.mxu0 %v220
  %275 = vmatprep.subr.mxu0 0.0
  %276 = vmatpush2.msra.mxu0 0.0
  %277 = vmatprep.subr.mxu0 0.0
  %278 = vmatpush2.msra.mxu0 0.0
  %279 = vmatprep.subr.mxu0 0.0
  %280 = vmatpush2.msra.mxu0 0.0
  %281 = vmatprep.subr.mxu0 0.0
  %282 = vmatpush2.msra.mxu0 0.0
  %283 = vmatprep.subr.mxu0 0.0
  %284 = vmatpush2.msra.mxu0 0.0
  %285 = vmatprep.subr.mxu0 0.0
  %286 = vmatpush2.msra.mxu0 0.0
  %287 = vmatprep.subr.mxu0 0.0
  %288 = vmatpush2.msra.mxu0 0.0
  %289 = vmatprep.subr.mxu0 0.0
  %290 = vmatpush2.msra.mxu0 0.0
  %291 = vmatprep.subr.mxu0 0.0
  %292 = vmatpush2.msra.mxu0 0.0
  %293 = vmatprep.subr.mxu0 0.0
  %294 = vmatpush2.msra.mxu0 0.0
  %295 = vmatprep.subr.mxu0 0.0
  %296 = vmatpush2.msra.mxu0 0.0
  %297 = vmatprep.subr.mxu0 0.0
  %298 = vmatpush2.msra.mxu0 0.0
  %299 = vmatprep.subr.mxu0 0.0
  %300 = vmatpush2.msra.mxu0 0.0
  %301 = vmatprep.subr.mxu0 0.0
  %302 = vmatpush2.msra.mxu0 0.0
  %303 = vmatprep.subr.mxu0 0.0
  %304 = vmatpush2.msra.mxu0 0.0
  %305 = vmatprep.subr.mxu0 0.0
  %306 = vmatpush2.msra.mxu0 0.0
  %307 = vmatprep.mubr.f32.mxu0 0.0
  %308 = vmatmul.mubr.f32.gmra.mxu0 %v218
  %v309 = vpop.f32.mrf.mxu0
  %v310 = vadd.f32 %v241, %v309
  %v311 = vpop.f32.mrf.mxu0
  %312 = vmatprep.mubr.f32.mxu0 0.0
  %313 = vmatmul.mubr.f32.gmra.mxu0 %v219
  %v314 = vpop.f32.mrf.mxu0
  %v315 = vadd.f32 %v241, %v314
  %v316 = vpop.f32.mrf.mxu0
  %317 = vdwg.mxu0
  %vm318 = vcmask 7168
  %319 = vst.msk [vmem:[%s7] sm:$0xff] %vm318, %v310
  %320 = vst.msk [vmem:[%s7 + $0x8] sm:$0xff] %vm318, %v315
  // Predicated region
  $region30: #{net_forward.1} parent=0 // pred_check
    _
  $region31: #{net_forward.1} parent=0 // pred_check_branch
    %322 = sbr.rel (0) target = $region33
  $region32: #{net_forward.1} parent=0 // pred_region
    _
  $region33: #{net_forward.1} parent=0 // pred_fallthru
    _
  // Predicated region
  $region34: #{net_forward.1} parent=0 // pred_check
    _
  $region35: #{net_forward.1} parent=0 // pred_check_branch
    %324 = sbr.rel (0) target = $region37
  $region36: #{net_forward.1} parent=0 // pred_region
    _
  $region37: #{net_forward.1} parent=0 // pred_fallthru
    _

</llo_original>
